<compile_context>
chip_gen: v7x
topology: tpu7x:2x2x1
jax: 0.10.0
libtpu: 0.0.40
codegen_flags: <defaults>
</compile_context>

<pallas_src>
import jax
import jax.numpy as jnp
from jax.experimental import pallas as pl
from jax.experimental.pallas import tpu as pltpu

_MIB = 1024 * 1024
_GELU_C = 0.7978845608028654  # sqrt(2/pi)


def _ffn_kernel_resident(x_ref, w1_ref, b1_ref, w2_ref, b2_ref, o_ref):
    """Weights-resident variant: full H in one step, no accumulator needed."""
    x = x_ref[...]                                                    # [TM, E]
    h = jnp.dot(x, w1_ref[...], preferred_element_type=jnp.float32) + b1_ref[...]
    c = jnp.float32(_GELU_C)
    g = 0.5 * h * (1.0 + jnp.tanh(c * (h + 0.044715 * (h * h * h))))  # tanh GELU
    out = jnp.dot(g.astype(w2_ref.dtype), w2_ref[...],
                  preferred_element_type=jnp.float32)                 # [TM, E]
    o_ref[...] = (out + b2_ref[...]).astype(o_ref.dtype)


def _ffn_kernel_stream(x_ref, w1_ref, b1_ref, w2_ref, b2_ref, o_ref, acc_ref):
    """Streaming variant: partial GELU(x@W1+b1)@W2 accumulated over H tiles."""
    h_idx = pl.program_id(1)

    x = x_ref[...]                                                    # [TM, E]
    h = jnp.dot(x, w1_ref[...], preferred_element_type=jnp.float32) + b1_ref[...]
    c = jnp.float32(_GELU_C)
    g = 0.5 * h * (1.0 + jnp.tanh(c * (h + 0.044715 * (h * h * h))))
    partial = jnp.dot(g.astype(w2_ref.dtype), w2_ref[...],
                      preferred_element_type=jnp.float32)             # [TM, E]

    @pl.when(h_idx == 0)
    def _first():
        acc_ref[...] = partial            # direct write: saves memset + RMW pass

    @pl.when(h_idx != 0)
    def _rest():
        acc_ref[...] += partial

    @pl.when(h_idx == pl.num_programs(1) - 1)
    def _finalize():
        o_ref[...] = (acc_ref[...] + b2_ref[...]).astype(o_ref.dtype)


def _physical_vmem_bytes():
    """Best-effort physical VMEM query (trace-time); default to 128 MiB."""
    try:
        info = pltpu.get_tpu_info()
        cap = int(getattr(info, "vmem_capacity_bytes", 128 * _MIB))
        if cap > 0:
            return cap
    except Exception:
        pass
    return 128 * _MIB


def _pick_tiles(M, E, H, act_itemsize, w_itemsize, budget_bytes, max_tm):
    """Choose (TM, TH, resident, est_vmem_bytes) that fits `budget_bytes`."""
    # per-hidden-element intermediates: h (f32), gelu (f32), cast copy (w dtype)
    inter_per_elem = 4 + 4 + w_itemsize

    def stream_bytes(tm, th):
        io = 2 * tm * E * act_itemsize                               # x + out (resident per i-tile)
        wt = 2 * ((E * th + th * E) * w_itemsize + (th + E) * 4)     # double-buffered W tiles + biases
        acc = tm * E * 4                                             # f32 accumulator scratch
        inter = tm * th * inter_per_elem                             # GELU intermediates
        return io + wt + acc + inter

    def resident_bytes(tm):
        io = 2 * tm * E * act_itemsize
        wt = 2 * ((E * H + H * E) * w_itemsize + (H + E) * 4)        # conservative: 2 buffers
        inter = tm * H * inter_per_elem
        return io + wt + inter

    # MXU-aligned token tiles, biggest first (arithmetic intensity of the
    # re-streamed weights scales with TM).
    tm_all = [c for c in (1024, 768, 512, 384, 256, 128, 64, 32, 16, 8) if M % c == 0]
    tm_cands = [c for c in tm_all if c <= max_tm] or tm_all or [M]
    th_cands = [c for c in (8192, 4096, 2048, 1024, 512, 256, 128) if H % c == 0] or [H]

    # 1) Weights-resident mode: W1/W2 DMA'd exactly once for the whole call.
    for tm in tm_cands:
        if tm >= min(256, M) and resident_bytes(tm) <= budget_bytes:
            return tm, H, True, resident_bytes(tm)

    # 2) Streaming over the hidden dim.
    for tm in tm_cands:
        for th in th_cands:
            if stream_bytes(tm, th) <= budget_bytes:
                return tm, th, False, stream_bytes(tm, th)

    # 3) Graceful fallback: smallest candidates (caller raises vmem_limit).
    tm, th = tm_cands[-1], th_cands[-1]
    return tm, th, False, stream_bytes(tm, th)


@jax.jit
def feed_forward(x, w1, b1, w2, b2):
    """x: [B, S, E]; w1: [E, 4E]; b1: [4E]; w2: [4E, E]; b2: [E]."""
    B, S, E = x.shape
    H = w1.shape[1]
    M = B * S

    compute_dtype = w1.dtype
    act_itemsize = jnp.dtype(compute_dtype).itemsize
    w_itemsize = jnp.dtype(w1.dtype).itemsize

    # Cast x once so BOTH matmuls hit the narrow (e.g. bf16) MXU fast path.
    x2d = x.reshape(M, E).astype(compute_dtype)
    b1_2d = b1.reshape(1, H)
    b2_2d = b2.reshape(1, E)

    cap = _physical_vmem_bytes()
    if cap <= 64 * _MIB:
        # v7x-class (64 MiB / TC): modest tiles, keep grid[0] >= 2 for megacore.
        budget, limit = 44 * _MIB, 56 * _MIB
        max_tm = max(M // 2, 8) if M >= 16 else M
    else:
        # v5e/v6e-class (128 MiB physical): use the real headroom.
        budget, limit = 64 * _MIB, 100 * _MIB
        max_tm = M

    tm, th, resident, est = _pick_tiles(M, E, H, act_itemsize, w_itemsize,
                                        budget, max_tm)
    grid_m = M // tm

    vmem_limit = limit
    if est + 8 * _MIB > vmem_limit:        # fallback picks: degrade gracefully
        vmem_limit = min(cap - 2 * _MIB, est + 16 * _MIB)
    vmem_limit = int(max(vmem_limit, 32 * _MIB))

    weight_reads = 1 if resident else grid_m
    cost = pl.CostEstimate(
        flops=int(4 * M * E * H),                       # two matmuls, 2*M*E*H each
        transcendentals=int(M * H),                     # one tanh per hidden element
        bytes_accessed=int(
            weight_reads * (w1.size + w2.size) * w_itemsize
            + 2 * M * E * act_itemsize                   # x read + out write
            + (b1.size + b2.size) * jnp.dtype(b1.dtype).itemsize),
    )

    out_shape = jax.ShapeDtypeStruct((M, E), x.dtype)

    if resident:
        grid = (grid_m,)
        in_specs = [
            pl.BlockSpec((tm, E), lambda i: (i, 0)),    # x tile
            pl.BlockSpec((E, H), lambda i: (0, 0)),     # W1 (resident, 1 DMA)
            pl.BlockSpec((1, H), lambda i: (0, 0)),     # b1 (resident)
            pl.BlockSpec((H, E), lambda i: (0, 0)),     # W2 (resident, 1 DMA)
            pl.BlockSpec((1, E), lambda i: (0, 0)),     # b2 (resident)
        ]
        out_specs = pl.BlockSpec((tm, E), lambda i: (i, 0))
        scratch = []
        kernel = _ffn_kernel_resident
        dims = ("parallel",)
    else:
        grid = (grid_m, H // th)
        in_specs = [
            pl.BlockSpec((tm, E), lambda i, h: (i, 0)),  # x tile (resident over h)
            pl.BlockSpec((E, th), lambda i, h: (0, h)),  # W1 column tile
            pl.BlockSpec((1, th), lambda i, h: (0, h)),  # b1 slice
            pl.BlockSpec((th, E), lambda i, h: (h, 0)),  # W2 row tile
            pl.BlockSpec((1, E), lambda i, h: (0, 0)),   # b2 (resident)
        ]
        out_specs = pl.BlockSpec((tm, E), lambda i, h: (i, 0))
        scratch = [pltpu.VMEM((tm, E), jnp.float32)]
        kernel = _ffn_kernel_stream
        dims = ("parallel", "arbitrary")

    out2d = pl.pallas_call(
        kernel,
        out_shape=out_shape,
        grid_spec=pltpu.PrefetchScalarGridSpec(
            num_scalar_prefetch=0,
            grid=grid,
            in_specs=in_specs,
            out_specs=out_specs,
            scratch_shapes=scratch,
        ),
        compiler_params=pltpu.CompilerParams(
            dimension_semantics=dims,
            vmem_limit_bytes=vmem_limit,
        ),
        cost_estimate=cost,
    )(x2d, w1, b1_2d, w2, b2_2d)

    return out2d.reshape(B, S, E)


def _reference(x, w1, b1, w2, b2):
    h = jnp.einsum('bse,eh->bsh', x, w1) + b1
    c = jnp.sqrt(2.0 / jnp.pi)
    g = 0.5 * h * (1.0 + jnp.tanh(c * (h + 0.044715 * h ** 3)))
    return jnp.einsum('bsh,he->bse', g, w2) + b2


if __name__ == "__main__":
    # Small config consistent with the module: cfg['emb_dim'] = 32
    B, S, E = 2, 8, 32
    H = 4 * E  # 128

    key = jax.random.PRNGKey(0)
    kx, k1, k2, k3, k4 = jax.random.split(key, 5)

    x = jax.random.normal(kx, (B, S, E), dtype=jnp.float32)
    # Deterministic parameter init; W stored as [in, out]
    w1 = jax.random.normal(k1, (E, H), dtype=jnp.float32) * (1.0 / jnp.sqrt(E))
    b1 = jax.random.normal(k2, (H,), dtype=jnp.float32) * 0.01
    w2 = jax.random.normal(k3, (H, E), dtype=jnp.float32) * (1.0 / jnp.sqrt(H))
    b2 = jax.random.normal(k4, (E,), dtype=jnp.float32) * 0.01

    out = jax.block_until_ready(feed_forward(x, w1, b1, w2, b2))
    ref = _reference(x, w1, b1, w2, b2)

    assert out.shape == (B, S, E)
    max_err = float(jnp.max(jnp.abs(out - ref)))
    assert jnp.allclose(out, ref, atol=1e-4, rtol=1e-4), max_err

    print("KERNEL_OK")
</pallas_src>

<mosaic_0001>
module attributes {stable_mosaic.version = 11 : i64} {
  func.func @_ffn_kernel_resident(%arg0: i32, %arg1: memref<16x32xf32, #tpu.memory_space<vmem>>, %arg2: memref<32x128xf32, #tpu.memory_space<vmem>>, %arg3: memref<1x128xf32, #tpu.memory_space<vmem>>, %arg4: memref<128x32xf32, #tpu.memory_space<vmem>>, %arg5: memref<1x32xf32, #tpu.memory_space<vmem>>, %arg6: memref<16x32xf32, #tpu.memory_space<vmem>>) attributes {dimension_semantics = [#tpu.dimension_semantics<parallel>], iteration_bounds = array<i64: 1>, scalar_prefetch = 0 : i64, scratch_operands = 0 : i64, tpu.core_type = #tpu.core_type<tc>, window_params = [{transform_indices = @transform_0, window_bounds = array<i64: 16, 32>}, {pipeline_mode = #tpu.pipeline_mode<synchronous>, transform_indices = @transform_1, window_bounds = array<i64: 32, 128>}, {pipeline_mode = #tpu.pipeline_mode<synchronous>, transform_indices = @transform_2, window_bounds = array<i64: 1, 128>}, {pipeline_mode = #tpu.pipeline_mode<synchronous>, transform_indices = @transform_3, window_bounds = array<i64: 128, 32>}, {pipeline_mode = #tpu.pipeline_mode<synchronous>, transform_indices = @transform_4, window_bounds = array<i64: 1, 32>}, {transform_indices = @transform_5, window_bounds = array<i64: 16, 32>}]} {
    %c0 = arith.constant 0 : index
    %c0_0 = arith.constant 0 : index
    %0 = vector.load %arg1[%c0, %c0_0] : memref<16x32xf32, #tpu.memory_space<vmem>>, vector<16x32xf32>
    %c0_1 = arith.constant 0 : index
    %c0_2 = arith.constant 0 : index
    %1 = vector.load %arg2[%c0_1, %c0_2] : memref<32x128xf32, #tpu.memory_space<vmem>>, vector<32x128xf32>
    %cst = arith.constant dense<0.000000e+00> : vector<16x128xf32>
    %2 = tpu.matmul %0, %1, %cst {dimension_numbers = #tpu.dot_dimension_numbers<[1], [0], [0], [1], [0, 0, 1, 1], [], []>} : vector<16x32xf32>, vector<32x128xf32>, vector<16x128xf32> -> vector<16x128xf32>
    %c0_3 = arith.constant 0 : index
    %c0_4 = arith.constant 0 : index
    %3 = vector.load %arg3[%c0_3, %c0_4] : memref<1x128xf32, #tpu.memory_space<vmem>>, vector<1x128xf32>
    %4 = vector.broadcast %3 : vector<1x128xf32> to vector<16x128xf32>
    %5 = arith.addf %2, %4 : vector<16x128xf32>
    %cst_5 = arith.constant 5.000000e-01 : f32
    %6 = vector.broadcast %cst_5 : f32 to vector<16x128xf32>
    %7 = arith.mulf %6, %5 : vector<16x128xf32>
    %8 = arith.mulf %5, %5 : vector<16x128xf32>
    %9 = arith.mulf %8, %5 : vector<16x128xf32>
    %cst_6 = arith.constant 4.471500e-02 : f32
    %10 = vector.broadcast %cst_6 : f32 to vector<16x128xf32>
    %11 = arith.mulf %10, %9 : vector<16x128xf32>
    %12 = arith.addf %5, %11 : vector<16x128xf32>
    %cst_7 = arith.constant 0.797884583 : f32
    %13 = vector.broadcast %cst_7 : f32 to vector<16x128xf32>
    %14 = arith.mulf %13, %12 : vector<16x128xf32>
    %15 = math.tanh %14 : vector<16x128xf32>
    %cst_8 = arith.constant 1.000000e+00 : f32
    %16 = vector.broadcast %cst_8 : f32 to vector<16x128xf32>
    %17 = arith.addf %16, %15 : vector<16x128xf32>
    %18 = arith.mulf %7, %17 : vector<16x128xf32>
    %c0_9 = arith.constant 0 : index
    %c0_10 = arith.constant 0 : index
    %19 = vector.load %arg4[%c0_9, %c0_10] : memref<128x32xf32, #tpu.memory_space<vmem>>, vector<128x32xf32>
    %cst_11 = arith.constant dense<0.000000e+00> : vector<16x32xf32>
    %20 = tpu.matmul %18, %19, %cst_11 {dimension_numbers = #tpu.dot_dimension_numbers<[1], [0], [0], [1], [0, 0, 1, 1], [], []>} : vector<16x128xf32>, vector<128x32xf32>, vector<16x32xf32> -> vector<16x32xf32>
    %c0_12 = arith.constant 0 : index
    %c0_13 = arith.constant 0 : index
    %21 = vector.load %arg5[%c0_12, %c0_13] : memref<1x32xf32, #tpu.memory_space<vmem>>, vector<1x32xf32>
    %22 = vector.broadcast %21 : vector<1x32xf32> to vector<16x32xf32>
    %23 = arith.addf %20, %22 : vector<16x32xf32>
    %c0_14 = arith.constant 0 : index
    %c0_15 = arith.constant 0 : index
    %24 = vector.load %arg6[%c0_14, %c0_15] : memref<16x32xf32, #tpu.memory_space<vmem>>, vector<16x32xf32>
    tpu.vector_store %arg6[%c0_14, %c0_15], %23 {strides = array<i32>} : memref<16x32xf32, #tpu.memory_space<vmem>>, vector<16x32xf32>,
    return
  }
  func.func @transform_0(%arg0: i32) -> (i32, i32) {
    %c0_i32 = arith.constant 0 : i32
    %c0_i32_0 = arith.constant 0 : i32
    return %arg0, %c0_i32 : i32, i32
  }
  func.func @transform_1(%arg0: i32) -> (i32, i32) {
    %c0_i32 = arith.constant 0 : i32
    %c0_i32_0 = arith.constant 0 : i32
    %c0_i32_1 = arith.constant 0 : i32
    return %c0_i32, %c0_i32_0 : i32, i32
  }
  func.func @transform_2(%arg0: i32) -> (i32, i32) {
    %c0_i32 = arith.constant 0 : i32
    %c0_i32_0 = arith.constant 0 : i32
    %c0_i32_1 = arith.constant 0 : i32
    return %c0_i32, %c0_i32_0 : i32, i32
  }
  func.func @transform_3(%arg0: i32) -> (i32, i32) {
    %c0_i32 = arith.constant 0 : i32
    %c0_i32_0 = arith.constant 0 : i32
    %c0_i32_1 = arith.constant 0 : i32
    return %c0_i32, %c0_i32_0 : i32, i32
  }
  func.func @transform_4(%arg0: i32) -> (i32, i32) {
    %c0_i32 = arith.constant 0 : i32
    %c0_i32_0 = arith.constant 0 : i32
    %c0_i32_1 = arith.constant 0 : i32
    return %c0_i32, %c0_i32_0 : i32, i32
  }
  func.func @transform_5(%arg0: i32) -> (i32, i32) {
    %c0_i32 = arith.constant 0 : i32
    %c0_i32_0 = arith.constant 0 : i32
    return %arg0, %c0_i32 : i32, i32
  }
}

</mosaic_0001>

<llo_original>
// kernel: feed_forward.1
$region0: #{feed_forward.1}
  #allocation0 [shape = 'u32[]', space=smem, size = 0x4, offset = 0x4, fixed_abs, tag = 'smem constant byte address 0x4 - core index']
  #allocation1 [shape = 'u32[144,128]{1,0:T(1,128)}', space=vmem, size = 0x12000, scoped, tag = 'internal scratch']
  %s0 = inlined_call_operand.hbm [shape: f32[16,32], index: 0, kind: input, shape index: {}]
  %s1 = inlined_call_operand.hbm [shape: f32[32,128], index: 1, kind: input, shape index: {}]
  %s2 = inlined_call_operand.hbm [shape: f32[1,128], index: 2, kind: input, shape index: {}]
  %s3 = inlined_call_operand.hbm [shape: f32[128,32], index: 3, kind: input, shape index: {}]
  %s4 = inlined_call_operand.hbm [shape: f32[1,32], index: 4, kind: input, shape index: {}]
  %s5 = inlined_call_operand.hbm [shape: f32[16,32], index: 5, kind: output, shape index: {}]
  %s6 = sld [smem:[#allocation0]]
  $region50: #{feed_forward.1} parent=0
    _
  %s8 = ssub.s32 1, %s6
  %s9 = scalar_select 0, %s8, %s6
  $region1: #{feed_forward.1} parent=0
    #allocation2 [shape = 'u8[8192]{0}', space=vmem, size = 0x2000, scoped, tag = 'input window, operand 0, single buffered']
    #allocation3 [shape = 's32[1]{0}', space=sflag, size = 0x4, scoped, tag = 'scoped memory for feed_forward.1']
    #allocation4 [shape = 's32[1]{0}', space=sflag, size = 0x4, scoped, tag = 'scoped memory for feed_forward.1']
    #allocation5 [shape = 'u8[16384]{0}', space=vmem, size = 0x4000, scoped, tag = 'input window, operand 1, single buffered']
    #allocation6 [shape = 's32[1]{0}', space=sflag, size = 0x4, scoped, tag = 'scoped memory for feed_forward.1']
    #allocation7 [shape = 'u8[512]{0}', space=vmem, size = 0x400, scoped, tag = 'input window, operand 2, single buffered']
    #allocation8 [shape = 'u8[65536]{0}', space=vmem, size = 0x10000, scoped, tag = 'input window, operand 3, single buffered']
    #allocation9 [shape = 's32[1]{0}', space=sflag, size = 0x4, scoped, tag = 'scoped memory for feed_forward.1']
    #allocation10 [shape = 'u8[512]{0}', space=vmem, size = 0x400, scoped, tag = 'input window, operand 4, single buffered']
    #allocation11 [shape = 'u8[8192]{0}', space=vmem, size = 0x2000, scoped, tag = 'output window, operand 0, single buffered']
    %10 = vsyncpa [#allocation3], 0
    %11 = vsyncpa [#allocation6], 0
    %12 = vsyncpa [#allocation9], 0
    %13 = vsyncpa [#allocation4], 0
    // Predicated region
    $region2: #{feed_forward.1} parent=1 // pred_check
      _
    $region3: #{feed_forward.1} parent=1 // pred_check_branch
      %15 = sbr.rel (0) target = $region5
    $region4: #{feed_forward.1} parent=1 // pred_region
      %s17 = ssub.s32 256, 256
      %18 = vsyncadd [#allocation3], %s17
      %s19 = sshll.u32 [#allocation2], 4
      %s20 = int_to_ptr.vmem [resolvable:$true] %s19
      %25 = dma.hbm_to_vmem [thread:$0]  %s0, 256, %s20, [#allocation3], 128, 128, 8
    $region5: #{feed_forward.1} parent=1 // pred_fallthru
      _
    // Predicated region
    $region6: #{feed_forward.1} parent=1 // pred_check
      _
    $region7: #{feed_forward.1} parent=1 // pred_check_branch
      %27 = sbr.rel (0) target = $region9
    $region8: #{feed_forward.1} parent=1 // pred_region
      %s29 = ssub.s32 512, 512
      %30 = vsyncadd [#allocation6], %s29
      %s31 = sshll.u32 [#allocation5], 4
      %s32 = int_to_ptr.vmem [resolvable:$true] %s31
      %37 = dma.hbm_to_vmem [thread:$0]  %s1, 512, %s32, [#allocation6], 128, 128, 8
    $region9: #{feed_forward.1} parent=1 // pred_fallthru
      _
    // Predicated region
    $region10: #{feed_forward.1} parent=1 // pred_check
      _
    $region11: #{feed_forward.1} parent=1 // pred_check_branch
      %39 = sbr.rel (0) target = $region13
    $region12: #{feed_forward.1} parent=1 // pred_region
      %s41 = ssub.s32 16, 16
      %42 = vsyncadd [#allocation6], %s41
      %s44 = sshll.u32 [#allocation7], 4
      %s45 = int_to_ptr.vmem [resolvable:$true] %s44
      %47 = dma.hbm_to_vmem [thread:$0]  %s2, 16, %s45, [#allocation6]
    $region13: #{feed_forward.1} parent=1 // pred_fallthru
      _
    // Predicated region
    $region14: #{feed_forward.1} parent=1 // pred_check
      _
    $region15: #{feed_forward.1} parent=1 // pred_check_branch
      %49 = sbr.rel (0) target = $region17
    $region16: #{feed_forward.1} parent=1 // pred_region
      %s51 = ssub.s32 2048, 2048
      %52 = vsyncadd [#allocation9], %s51
      %s53 = sshll.u32 [#allocation8], 4
      %s54 = int_to_ptr.vmem [resolvable:$true] %s53
      %59 = dma.hbm_to_vmem [thread:$0]  %s3, 2048, %s54, [#allocation9], 128, 128, 8
    $region17: #{feed_forward.1} parent=1 // pred_fallthru
      _
    // Predicated region
    $region18: #{feed_forward.1} parent=1 // pred_check
      _
    $region19: #{feed_forward.1} parent=1 // pred_check_branch
      %61 = sbr.rel (0) target = $region21
    $region20: #{feed_forward.1} parent=1 // pred_region
      %s63 = ssub.s32 16, 16
      %64 = vsyncadd [#allocation9], %s63
      %s66 = sshll.u32 [#allocation10], 4
      %s67 = int_to_ptr.vmem [resolvable:$true] %s66
      %69 = dma.hbm_to_vmem [thread:$0]  %s4, 16, %s67, [#allocation9]
    $region21: #{feed_forward.1} parent=1 // pred_fallthru
      _
    // Predicated region
    $region22: #{feed_forward.1} parent=1 // pred_check
      _
    $region23: #{feed_forward.1} parent=1 // pred_check_branch
      %71 = sbr.rel (0) target = $region25
    $region24: #{feed_forward.1} parent=1 // pred_region
      %72 = dma.done [#allocation3], 256
    $region25: #{feed_forward.1} parent=1 // pred_fallthru
      _
    // Predicated region
    $region26: #{feed_forward.1} parent=1 // pred_check
      _
    $region27: #{feed_forward.1} parent=1 // pred_check_branch
      %74 = sbr.rel (0) target = $region29
    $region28: #{feed_forward.1} parent=1 // pred_region
      %75 = dma.done [#allocation6], 512
    $region29: #{feed_forward.1} parent=1 // pred_fallthru
      _
    // Predicated region
    $region30: #{feed_forward.1} parent=1 // pred_check
      _
    $region31: #{feed_forward.1} parent=1 // pred_check_branch
      %77 = sbr.rel (0) target = $region33
    $region32: #{feed_forward.1} parent=1 // pred_region
      %78 = dma.done [#allocation6], 16
    $region33: #{feed_forward.1} parent=1 // pred_fallthru
      _
    // Predicated region
    $region34: #{feed_forward.1} parent=1 // pred_check
      _
    $region35: #{feed_forward.1} parent=1 // pred_check_branch
      %80 = sbr.rel (0) target = $region37
    $region36: #{feed_forward.1} parent=1 // pred_region
      %81 = dma.done [#allocation9], 2048
    $region37: #{feed_forward.1} parent=1 // pred_fallthru
      _
    // Predicated region
    $region38: #{feed_forward.1} parent=1 // pred_check
      _
    $region39: #{feed_forward.1} parent=1 // pred_check_branch
      %83 = sbr.rel (0) target = $region41
    $region40: #{feed_forward.1} parent=1 // pred_region
      %84 = dma.done [#allocation9], 16
    $region41: #{feed_forward.1} parent=1 // pred_fallthru
      _
    %v85 = vld [vmem:[#allocation2] sm:$0xff]
    %v86 = vld [vmem:[#allocation2 + $0x8] sm:$0xff]
    %v87 = vld [vmem:[#allocation5] sm:$0xff]
    %v88 = vld [vmem:[#allocation5 + $0x8] sm:$0xff]
    %v89 = vld [vmem:[#allocation5 + $0x10] sm:$0xff]
    %v90 = vld [vmem:[#allocation5 + $0x18] sm:$0xff]
    %v91 = vld [vmem:[#allocation7] sm:$0x1]
    %v93 = vlaneseq
    %v94 = vshrl.u32 %v93, 7
    %v95 = vsub.s32 0, %v94
    %v96 = vrot.slane %v91, %v95
    %vm98 = vcmask 261120
    %v100 = vsel %vm98, %v85, 0
    %v103 = vsel %vm98, %v86, 0
    %105 = vmatprep.subr.mxu0 0.0
    %106 = vmatpush1.msra.mxu0 %v87
    %107 = vmatprep.subr.mxu0 0.0
    %108 = vmatpush1.msra.mxu0 %v88
    %109 = vmatprep.subr.mxu0 0.0
    %110 = vmatpush1.msra.mxu0 %v89
    %111 = vmatprep.subr.mxu0 0.0
    %112 = vmatpush1.msra.mxu0 %v90
    %113 = vmatprep.subr.mxu0 0.0
    %114 = vmatpush1.msra.mxu0 0.0
    %115 = vmatprep.subr.mxu0 0.0
    %116 = vmatpush1.msra.mxu0 0.0
    %117 = vmatprep.subr.mxu0 0.0
    %118 = vmatpush1.msra.mxu0 0.0
    %119 = vmatprep.subr.mxu0 0.0
    %120 = vmatpush1.msra.mxu0 0.0
    %121 = vmatprep.subr.mxu0 0.0
    %122 = vmatpush1.msra.mxu0 0.0
    %123 = vmatprep.subr.mxu0 0.0
    %124 = vmatpush1.msra.mxu0 0.0
    %125 = vmatprep.subr.mxu0 0.0
    %126 = vmatpush1.msra.mxu0 0.0
    %127 = vmatprep.subr.mxu0 0.0
    %128 = vmatpush1.msra.mxu0 0.0
    %129 = vmatprep.subr.mxu0 0.0
    %130 = vmatpush1.msra.mxu0 0.0
    %131 = vmatprep.subr.mxu0 0.0
    %132 = vmatpush1.msra.mxu0 0.0
    %133 = vmatprep.subr.mxu0 0.0
    %134 = vmatpush1.msra.mxu0 0.0
    %135 = vmatprep.subr.mxu0 0.0
    %136 = vmatpush1.msra.mxu0 0.0
    %137 = vmatprep.subr.mxu0 0.0
    %138 = vmatpush1.msra.mxu0 0.0
    %139 = vmatprep.subr.mxu0 0.0
    %140 = vmatpush1.msra.mxu0 0.0
    %141 = vmatprep.subr.mxu0 0.0
    %142 = vmatpush1.msra.mxu0 0.0
    %143 = vmatprep.subr.mxu0 0.0
    %144 = vmatpush1.msra.mxu0 0.0
    %145 = vmatprep.subr.mxu0 0.0
    %146 = vmatpush1.msra.mxu0 0.0
    %147 = vmatprep.subr.mxu0 0.0
    %148 = vmatpush1.msra.mxu0 0.0
    %149 = vmatprep.subr.mxu0 0.0
    %150 = vmatpush1.msra.mxu0 0.0
    %151 = vmatprep.subr.mxu0 0.0
    %152 = vmatpush1.msra.mxu0 0.0
    %153 = vmatprep.subr.mxu0 0.0
    %154 = vmatpush1.msra.mxu0 0.0
    %155 = vmatprep.subr.mxu0 0.0
    %156 = vmatpush1.msra.mxu0 0.0
    %157 = vmatprep.subr.mxu0 0.0
    %158 = vmatpush1.msra.mxu0 0.0
    %159 = vmatprep.subr.mxu0 0.0
    %160 = vmatpush1.msra.mxu0 0.0
    %161 = vmatprep.subr.mxu0 0.0
    %162 = vmatpush1.msra.mxu0 0.0
    %163 = vmatprep.subr.mxu0 0.0
    %164 = vmatpush1.msra.mxu0 0.0
    %165 = vmatprep.subr.mxu0 0.0
    %166 = vmatpush1.msra.mxu0 0.0
    %167 = vmatprep.subr.mxu0 0.0
    %168 = vmatpush1.msra.mxu0 0.0
    %169 = vmatprep.mubr.f32.mxu0 0.0
    %170 = vmatmul.mubr.f32.gmra.mrb[0].mxu0 %v100
    %v171 = vpop.f32.mrb[0].mxu0
    %v172 = vadd.f32 %v96, %v171
    %v173 = vpop.f32.mrb[0].mxu0
    %174 = vmatprep.mubr.f32.mxu0 0.0
    %175 = vmatmul.mubr.f32.gmra.mrb[0].mxu0 %v103
    %v176 = vpop.f32.mrb[0].mxu0
    %v177 = vadd.f32 %v96, %v176
    %v178 = vpop.f32.mrb[0].mxu0
    %179 = vdwg.mxu0
    %v180 = vmul.f32 %v172, 0.5
    %v181 = vmul.f32 %v177, 0.5
    %v182 = vmul.f32 %v172, %v172
    %v183 = vmul.f32 %v177, %v177
    %v184 = vmul.f32 %v182, %v172
    %v185 = vmul.f32 %v183, %v177
    %v186 = vmul.f32 %v184, 0.044715
    %v187 = vmul.f32 %v185, 0.044715
    %v188 = vadd.f32 %v172, %v186
    %v189 = vadd.f32 %v177, %v187
    %v190 = vmul.f32 %v188, 0.7978846
    %v191 = vmul.f32 %v189, 0.7978846
    %v192 = vtanh.pop %v190
    %v193 = vtanh.pop %v191
    %v194 = vadd.f32 %v192, 1.0
    %v195 = vadd.f32 %v193, 1.0
    %v196 = vmul.f32 %v180, %v194
    %v197 = vmul.f32 %v181, %v195
    %v198 = vld [vmem:[#allocation8] sm:$0xff]
    %v199 = vld [vmem:[#allocation8 + $0x8] sm:$0xff]
    %v200 = vld [vmem:[#allocation8 + $0x10] sm:$0xff]
    %v201 = vld [vmem:[#allocation8 + $0x18] sm:$0xff]
    %v202 = vld [vmem:[#allocation8 + $0x20] sm:$0xff]
    %v203 = vld [vmem:[#allocation8 + $0x28] sm:$0xff]
    %v204 = vld [vmem:[#allocation8 + $0x30] sm:$0xff]
    %v205 = vld [vmem:[#allocation8 + $0x38] sm:$0xff]
    %v206 = vld [vmem:[#allocation8 + $0x40] sm:$0xff]
    %v207 = vld [vmem:[#allocation8 + $0x48] sm:$0xff]
    %v208 = vld [vmem:[#allocation8 + $0x50] sm:$0xff]
    %v209 = vld [vmem:[#allocation8 + $0x58] sm:$0xff]
    %v210 = vld [vmem:[#allocation8 + $0x60] sm:$0xff]
    %v211 = vld [vmem:[#allocation8 + $0x68] sm:$0xff]
    %v212 = vld [vmem:[#allocation8 + $0x70] sm:$0xff]
    %v213 = vld [vmem:[#allocation8 + $0x78] sm:$0xff]
    %v214 = vld [vmem:[#allocation10] sm:$0x1]
    %v216 = vlaneseq
    %v217 = vshrl.u32 %v216, 7
    %v218 = vsub.s32 0, %v217
    %v219 = vrot.slane %v214, %v218
    %221 = vmatprep.subr.mxu0 0.0
    %222 = vmatpush1.msra.mxu0 %v198
    %223 = vmatprep.subr.mxu0 0.0
    %224 = vmatpush1.msra.mxu0 %v199
    %225 = vmatprep.subr.mxu0 0.0
    %226 = vmatpush1.msra.mxu0 %v200
    %227 = vmatprep.subr.mxu0 0.0
    %228 = vmatpush1.msra.mxu0 %v201
    %229 = vmatprep.subr.mxu0 0.0
    %230 = vmatpush1.msra.mxu0 %v202
    %231 = vmatprep.subr.mxu0 0.0
    %232 = vmatpush1.msra.mxu0 %v203
    %233 = vmatprep.subr.mxu0 0.0
    %234 = vmatpush1.msra.mxu0 %v204
    %235 = vmatprep.subr.mxu0 0.0
    %236 = vmatpush1.msra.mxu0 %v205
    %237 = vmatprep.subr.mxu0 0.0
    %238 = vmatpush1.msra.mxu0 %v206
    %239 = vmatprep.subr.mxu0 0.0
    %240 = vmatpush1.msra.mxu0 %v207
    %241 = vmatprep.subr.mxu0 0.0
    %242 = vmatpush1.msra.mxu0 %v208
    %243 = vmatprep.subr.mxu0 0.0
    %244 = vmatpush1.msra.mxu0 %v209
    %245 = vmatprep.subr.mxu0 0.0
    %246 = vmatpush1.msra.mxu0 %v210
    %247 = vmatprep.subr.mxu0 0.0
    %248 = vmatpush1.msra.mxu0 %v211
    %249 = vmatprep.subr.mxu0 0.0
    %250 = vmatpush1.msra.mxu0 %v212
    %251 = vmatprep.subr.mxu0 0.0
    %252 = vmatpush1.msra.mxu0 %v213
    %253 = vmatprep.subr.mxu0 0.0
    %254 = vmatpush1.msra.mxu0 0.0
    %255 = vmatprep.subr.mxu0 0.0
    %256 = vmatpush1.msra.mxu0 0.0
    %257 = vmatprep.subr.mxu0 0.0
    %258 = vmatpush1.msra.mxu0 0.0
    %259 = vmatprep.subr.mxu0 0.0
    %260 = vmatpush1.msra.mxu0 0.0
    %261 = vmatprep.subr.mxu0 0.0
    %262 = vmatpush1.msra.mxu0 0.0
    %263 = vmatprep.subr.mxu0 0.0
    %264 = vmatpush1.msra.mxu0 0.0
    %265 = vmatprep.subr.mxu0 0.0
    %266 = vmatpush1.msra.mxu0 0.0
    %267 = vmatprep.subr.mxu0 0.0
    %268 = vmatpush1.msra.mxu0 0.0
    %269 = vmatprep.subr.mxu0 0.0
    %270 = vmatpush1.msra.mxu0 0.0
    %271 = vmatprep.subr.mxu0 0.0
    %272 = vmatpush1.msra.mxu0 0.0
    %273 = vmatprep.subr.mxu0 0.0
    %274 = vmatpush1.msra.mxu0 0.0
    %275 = vmatprep.subr.mxu0 0.0
    %276 = vmatpush1.msra.mxu0 0.0
    %277 = vmatprep.subr.mxu0 0.0
    %278 = vmatpush1.msra.mxu0 0.0
    %279 = vmatprep.subr.mxu0 0.0
    %280 = vmatpush1.msra.mxu0 0.0
    %281 = vmatprep.subr.mxu0 0.0
    %282 = vmatpush1.msra.mxu0 0.0
    %283 = vmatprep.subr.mxu0 0.0
    %284 = vmatpush1.msra.mxu0 0.0
    %285 = vmatprep.mubr.f32.mxu0 0.0
    %286 = vmatmul.mubr.f32.gmra.mrb[0].mxu0 %v196
    %v287 = vpop.f32.mrb[0].mxu0
    %v288 = vadd.f32 %v219, %v287
    %v289 = vpop.f32.mrb[0].mxu0
    %290 = vmatprep.mubr.f32.mxu0 0.0
    %291 = vmatmul.mubr.f32.gmra.mrb[0].mxu0 %v197
    %v292 = vpop.f32.mrb[0].mxu0
    %v293 = vadd.f32 %v219, %v292
    %v294 = vpop.f32.mrb[0].mxu0
    %295 = vdwg.mxu0
    %296 = vst.msk [vmem:[#allocation11] sm:$0xff] %vm98, %v288
    %297 = vst.msk [vmem:[#allocation11 + $0x8] sm:$0xff] %vm98, %v293
    // Predicated region
    $region42: #{feed_forward.1} parent=1 // pred_check
      _
    $region43: #{feed_forward.1} parent=1 // pred_check_branch
      %299 = sbr.rel (0) target = $region45
    $region44: #{feed_forward.1} parent=1 // pred_region
      %s301 = ssub.s32 256, 256
      %302 = vsyncadd [#allocation4], %s301
      %s303 = sshll.u32 [#allocation11], 4
      %s304 = int_to_ptr.vmem [resolvable:$true] %s303
      %309 = dma.vmem_to_hbm [thread:$0]  %s304, 256, %s5, [#allocation4], 128, 128, 8
    $region45: #{feed_forward.1} parent=1 // pred_fallthru
      _
    // Predicated region
    $region46: #{feed_forward.1} parent=1 // pred_check
      _
    $region47: #{feed_forward.1} parent=1 // pred_check_branch
      %311 = sbr.rel (0) target = $region49
    $region48: #{feed_forward.1} parent=1 // pred_region
      %312 = dma.done [#allocation4], 256
    $region49: #{feed_forward.1} parent=1 // pred_fallthru
      _
    %313 = vsyncpa [#allocation3], 1
    %314 = vsyncpa [#allocation6], 1
    %315 = vsyncpa [#allocation9], 1
    %316 = vsyncpa [#allocation4], 1

</llo_original>
